<compile_context>
chip_gen: v5e
topology: v5e:2x2
jax: 0.10.0
libtpu: 0.0.40
codegen_flags: <defaults>
</compile_context>

<pallas_src>
import functools

import jax
import jax.numpy as jnp
from jax.experimental import pallas as pl
from jax.experimental.pallas import tpu as pltpu


def _swap_axes_kernel(x_ref, o_ref):
    # x_ref tile: (TB, T1, T2) -> o_ref tile: (TB, T2, T1)
    o_ref[...] = jnp.swapaxes(x_ref[...], 1, 2)


def _pick_tile(dim: int) -> int:
    """Largest 128-multiple tile (<=512) that divides `dim`, else the full dim."""
    for t in (512, 256, 128):
        if dim % t == 0:
            return min(t, dim)
    return dim


def swap_axes(x: jax.Array) -> jax.Array:
    """Pallas equivalent of torch.Tensor.transpose(1, 2) for a 3-D input."""
    B, D1, D2 = x.shape
    itemsize = jnp.dtype(x.dtype).itemsize

    # Tile the last two dims with (8,128)-aligned blocks when possible.
    T1 = _pick_tile(D1)
    T2 = _pick_tile(D2)

    # Block multiple batch slices per step when the (T1, T2) tile is small,
    # targeting ~1 MiB per block (per ref) so 2 refs x 2 buffers fits easily
    # in every generation's scoped VMEM budget.
    tile_bytes = max(T1 * T2 * itemsize, 1)
    target_bytes = 1 << 20
    TB = max(1, min(B, target_bytes // tile_bytes))
    while B % TB != 0:
        TB -= 1

    grid = (B // TB, D2 // T2, D1 // T1)  # i (D1-tile) innermost -> lane-dense
    # output writeback streams contiguously.

    cost = pl.CostEstimate(
        flops=0,
        transcendentals=0,
        bytes_accessed=2 * B * D1 * D2 * itemsize,
    )

    return pl.pallas_call(
        _swap_axes_kernel,
        out_shape=jax.ShapeDtypeStruct((B, D2, D1), x.dtype),
        grid_spec=pltpu.PrefetchScalarGridSpec(
            num_scalar_prefetch=0,
            grid=grid,
            in_specs=[pl.BlockSpec((TB, T1, T2), lambda b, j, i: (b, i, j))],
            out_specs=pl.BlockSpec((TB, T2, T1), lambda b, j, i: (b, j, i)),
        ),
        compiler_params=pltpu.CompilerParams(
            dimension_semantics=("parallel", "parallel", "parallel"),
        ),
        cost_estimate=cost,
    )(x)


if __name__ == "__main__":
    key = jax.random.PRNGKey(0)

    # Small shape implied by the module: (batch=2, seq=8, hidden=32).
    # Exercises the full-dim fallback (dims < 128) + batch blocking.
    x_small = jax.random.normal(key, (2, 8, 32), dtype=jnp.float32)
    y_small = swap_axes(x_small)
    jax.block_until_ready(y_small)
    assert y_small.shape == (2, 32, 8), y_small.shape
    assert jnp.array_equal(y_small, jnp.swapaxes(x_small, 1, 2)), (
        "mismatch vs. reference transpose (small shape)"
    )

    # Slightly larger shape to exercise the tiled (128-multiple) path.
    x_big = jax.random.normal(jax.random.PRNGKey(1), (2, 256, 384), dtype=jnp.float32)
    y_big = swap_axes(x_big)
    jax.block_until_ready(y_big)
    assert y_big.shape == (2, 384, 256), y_big.shape
    assert jnp.array_equal(y_big, jnp.swapaxes(x_big, 1, 2)), (
        "mismatch vs. reference transpose (tiled shape)"
    )

    print("KERNEL_OK")
</pallas_src>

<mosaic_0001>
module attributes {stable_mosaic.version = 11 : i64} {
  func.func @_swap_axes_kernel(%arg0: i32, %arg1: i32, %arg2: i32, %arg3: memref<2x8x32xf32, #tpu.memory_space<vmem>>, %arg4: memref<2x32x8xf32, #tpu.memory_space<vmem>>) attributes {dimension_semantics = [#tpu.dimension_semantics<parallel>, #tpu.dimension_semantics<parallel>, #tpu.dimension_semantics<parallel>], iteration_bounds = array<i64: 1, 1, 1>, scalar_prefetch = 0 : i64, scratch_operands = 0 : i64, tpu.core_type = #tpu.core_type<tc>, window_params = [{transform_indices = @transform_0, window_bounds = array<i64: 2, 8, 32>}, {transform_indices = @transform_1, window_bounds = array<i64: 2, 32, 8>}]} {
    %c0 = arith.constant 0 : index
    %c0_0 = arith.constant 0 : index
    %c0_1 = arith.constant 0 : index
    %0 = vector.load %arg3[%c0, %c0_0, %c0_1] : memref<2x8x32xf32, #tpu.memory_space<vmem>>, vector<2x8x32xf32>
    %1 = tpu.transpose %0, [0, 2, 1] : vector<2x8x32xf32> -> vector<2x32x8xf32>
    %c0_2 = arith.constant 0 : index
    %c0_3 = arith.constant 0 : index
    %c0_4 = arith.constant 0 : index
    %2 = vector.load %arg4[%c0_2, %c0_3, %c0_4] : memref<2x32x8xf32, #tpu.memory_space<vmem>>, vector<2x32x8xf32>
    tpu.vector_store %arg4[%c0_2, %c0_3, %c0_4], %1 {strides = array<i32>} : memref<2x32x8xf32, #tpu.memory_space<vmem>>, vector<2x32x8xf32>,
    return
  }
  func.func @transform_0(%arg0: i32, %arg1: i32, %arg2: i32) -> (i32, i32, i32) {
    %c0_i32 = arith.constant 0 : i32
    return %arg0, %arg2, %arg1 : i32, i32, i32
  }
  func.func @transform_1(%arg0: i32, %arg1: i32, %arg2: i32) -> (i32, i32, i32) {
    %c0_i32 = arith.constant 0 : i32
    return %arg0, %arg1, %arg2 : i32, i32, i32
  }
}

</mosaic_0001>

<llo_original>
// kernel: tpu_custom_call.1
$region0: #{tpu_custom_call.1}
  #allocation0 [shape = 'u32[]', space=smem, size = 0x4, offset = 0x4, fixed_abs, tag = 'smem constant byte address 0x4 - core index']
  #allocation1 [shape = 'u32[72,128]{1,0:T(1,128)}', space=vmem, size = 0x9000, scoped, tag = 'internal scratch']
  %s0 = inlined_call_operand.hbm [shape: f32[2,8,32], index: 0, kind: input, shape index: {}]
  %s1 = inlined_call_operand.vmem [shape: f32[2,32,8], index: 1, kind: output, shape index: {}]
  %s2 = sld [smem:[#allocation0]]
  $region18: #{tpu_custom_call.1} parent=0
    _
  %s4 = ssub.s32 1, %s2
  %s5 = scalar_select 0, %s4, %s2
  $region1: #{tpu_custom_call.1} parent=0
    #allocation2 [shape = 'u8[8192]{0}', space=vmem, size = 0x2000, scoped, tag = 'input window, operand 0, single buffered']
    #allocation3 [shape = 's32[1]{0}', space=sflag, size = 0x4, scoped, tag = 'scoped memory for tpu_custom_call.1']
    %6 = vsyncpa [#allocation3], 0
    // Predicated region
    $region2: #{tpu_custom_call.1} parent=1 // pred_check
      _
    $region3: #{tpu_custom_call.1} parent=1 // pred_check_branch
      %8 = sbr.rel (0) target = $region5
    $region4: #{tpu_custom_call.1} parent=1 // pred_region
      %10 = vsyncadd [#allocation3], 0
      %s11 = sshll.u32 %s0, 4
      %s12 = int_to_ptr.hbm [resolvable:$true] %s11
      %s13 = sshll.u32 [#allocation2], 4
      %s14 = int_to_ptr.vmem [resolvable:$true] %s13
      %19 = dma.hbm_to_vmem [thread:$0]  %s12, 256, %s14, [#allocation3], 128, 128, 8
    $region5: #{tpu_custom_call.1} parent=1 // pred_fallthru
      _
    // Predicated region
    $region6: #{tpu_custom_call.1} parent=1 // pred_check
      _
    $region7: #{tpu_custom_call.1} parent=1 // pred_check_branch
      %21 = sbr.rel (0) target = $region9
    $region8: #{tpu_custom_call.1} parent=1 // pred_region
      %23 = dma.done [#allocation3], 256
    $region9: #{tpu_custom_call.1} parent=1 // pred_fallthru
      _
    %v24 = vld [vmem:[#allocation2] sm:$0xff]
    %v25 = vld [vmem:[#allocation2 + $0x8] sm:$0xff]
    %26 = vxpose.xlu0.b32.start [1/16] %v24, 128
    %27 = vxpose.xlu0.b32.cont [2/16] 0.0, 128
    %28 = vxpose.xlu0.b32.cont [3/16] 0.0, 128
    %29 = vxpose.xlu0.b32.cont [4/16] 0.0, 128
    %30 = vxpose.xlu0.b32.cont [5/16] 0.0, 128
    %31 = vxpose.xlu0.b32.cont [6/16] 0.0, 128
    %32 = vxpose.xlu0.b32.cont [7/16] 0.0, 128
    %33 = vxpose.xlu0.b32.cont [8/16] 0.0, 128
    %34 = vxpose.xlu0.b32.cont [9/16] 0.0, 128
    %35 = vxpose.xlu0.b32.cont [10/16] 0.0, 128
    %36 = vxpose.xlu0.b32.cont [11/16] 0.0, 128
    %37 = vxpose.xlu0.b32.cont [12/16] 0.0, 128
    %38 = vxpose.xlu0.b32.cont [13/16] 0.0, 128
    %39 = vxpose.xlu0.b32.cont [14/16] 0.0, 128
    %40 = vxpose.xlu0.b32.cont [15/16] 0.0, 128
    %41 = vxpose.xlu0.b32.end [16/16] 0.0, 128
    %v42 = vpop.trf.xlu0
    %v43 = vpop.trf.xlu0
    %v44 = vpop.trf.xlu0
    %v45 = vpop.trf.xlu0
    %v46 = vpop.trf.xlu0
    %v47 = vpop.trf.xlu0
    %v48 = vpop.trf.xlu0
    %v49 = vpop.trf.xlu0
    %v50 = vpop.trf.xlu0
    %v51 = vpop.trf.xlu0
    %v52 = vpop.trf.xlu0
    %v53 = vpop.trf.xlu0
    %v54 = vpop.trf.xlu0
    %v55 = vpop.trf.xlu0
    %v56 = vpop.trf.xlu0
    %v57 = vpop.trf.xlu0
    %58 = vxpose.xlu0.b32.start [1/16] %v25, 128
    %59 = vxpose.xlu0.b32.cont [2/16] 0.0, 128
    %60 = vxpose.xlu0.b32.cont [3/16] 0.0, 128
    %61 = vxpose.xlu0.b32.cont [4/16] 0.0, 128
    %62 = vxpose.xlu0.b32.cont [5/16] 0.0, 128
    %63 = vxpose.xlu0.b32.cont [6/16] 0.0, 128
    %64 = vxpose.xlu0.b32.cont [7/16] 0.0, 128
    %65 = vxpose.xlu0.b32.cont [8/16] 0.0, 128
    %66 = vxpose.xlu0.b32.cont [9/16] 0.0, 128
    %67 = vxpose.xlu0.b32.cont [10/16] 0.0, 128
    %68 = vxpose.xlu0.b32.cont [11/16] 0.0, 128
    %69 = vxpose.xlu0.b32.cont [12/16] 0.0, 128
    %70 = vxpose.xlu0.b32.cont [13/16] 0.0, 128
    %71 = vxpose.xlu0.b32.cont [14/16] 0.0, 128
    %72 = vxpose.xlu0.b32.cont [15/16] 0.0, 128
    %73 = vxpose.xlu0.b32.end [16/16] 0.0, 128
    %v74 = vpop.trf.xlu0
    %v75 = vpop.trf.xlu0
    %v76 = vpop.trf.xlu0
    %v77 = vpop.trf.xlu0
    %v78 = vpop.trf.xlu0
    %v79 = vpop.trf.xlu0
    %v80 = vpop.trf.xlu0
    %v81 = vpop.trf.xlu0
    %v82 = vpop.trf.xlu0
    %v83 = vpop.trf.xlu0
    %v84 = vpop.trf.xlu0
    %v85 = vpop.trf.xlu0
    %v86 = vpop.trf.xlu0
    %v87 = vpop.trf.xlu0
    %v88 = vpop.trf.xlu0
    %v89 = vpop.trf.xlu0
    %vm90 = vcmask 64512
    %91 = vst.msk [vmem:[%s1] sm:$0xff] %vm90, %v42
    %92 = vst.msk [vmem:[%s1 + $0x8] sm:$0xff] %vm90, %v43
    %93 = vst.msk [vmem:[%s1 + $0x10] sm:$0xff] %vm90, %v44
    %94 = vst.msk [vmem:[%s1 + $0x18] sm:$0xff] %vm90, %v45
    %95 = vst.msk [vmem:[%s1 + $0x20] sm:$0xff] %vm90, %v74
    %96 = vst.msk [vmem:[%s1 + $0x28] sm:$0xff] %vm90, %v75
    %97 = vst.msk [vmem:[%s1 + $0x30] sm:$0xff] %vm90, %v76
    %98 = vst.msk [vmem:[%s1 + $0x38] sm:$0xff] %vm90, %v77
    // Predicated region
    $region10: #{tpu_custom_call.1} parent=1 // pred_check
      _
    $region11: #{tpu_custom_call.1} parent=1 // pred_check_branch
      %100 = sbr.rel (0) target = $region13
    $region12: #{tpu_custom_call.1} parent=1 // pred_region
      _
    $region13: #{tpu_custom_call.1} parent=1 // pred_fallthru
      _
    // Predicated region
    $region14: #{tpu_custom_call.1} parent=1 // pred_check
      _
    $region15: #{tpu_custom_call.1} parent=1 // pred_check_branch
      %102 = sbr.rel (0) target = $region17
    $region16: #{tpu_custom_call.1} parent=1 // pred_region
      _
    $region17: #{tpu_custom_call.1} parent=1 // pred_fallthru
      _
    %103 = vsyncpa [#allocation3], 1

</llo_original>
